<compile_context>
chip_gen: v6e
topology: v6e:2x2x1
jax: 0.10.0
libtpu: 0.0.40
codegen_flags: <defaults>
</compile_context>

<pallas_src>
import jax
import jax.numpy as jnp
from jax.experimental import pallas as pl
from jax.experimental.pallas import tpu as pltpu

_LANE = 128
_SUBLANE = 8


def _input_scaler_kernel(x_ref, loc_ref, inv_scale_ref, o_ref):
    # Load the (1, D) broadcast rows once per tile and reuse them.
    loc = loc_ref[...]
    inv_scale = inv_scale_ref[...]
    # One vsub + one vmul per vreg; no divide (inv_scale precomputed).
    o_ref[...] = (x_ref[...] - loc) * inv_scale


def _round_up(x, m):
    return (x + m - 1) // m * m


def input_scaler_forward(x, loc, inv_scale, *, max_tile_rows=1024,
                         vmem_budget_bytes=24 << 20):
    """(x - loc) * inv_scale with a row-tiled Pallas kernel.

    x:         (N, D)
    loc:       (1, D)
    inv_scale: (1, D)  -- precomputed 1/scale (zero-guarded in init_weights)
    """
    N, D = x.shape
    assert loc.shape == (1, D) and inv_scale.shape == (1, D)
    out_dtype = x.dtype
    itemsize = jnp.dtype(out_dtype).itemsize

    # Lane-dense feature axis: pad D up to a multiple of 128 (unmasked stores).
    D_pad = max(_LANE, _round_up(D, _LANE))

    # Largest row tile that fits the VMEM budget, assuming double-buffered
    # x tile + out tile ~= 4 * tile_rows * D_pad * itemsize. Budget is sized
    # for v7x's 64 MiB VMEM with headroom (fine on v5e/v6e's 128 MiB too).
    rows_budget = max(_SUBLANE, vmem_budget_bytes // (4 * D_pad * itemsize))
    tile_rows = min(max_tile_rows, rows_budget, _round_up(N, _SUBLANE))
    tile_rows = max(_SUBLANE, (tile_rows // _SUBLANE) * _SUBLANE)

    # Pad rows so the grid divides evenly; padded region is sliced off below.
    N_pad = _round_up(N, tile_rows)

    x_p = x
    if (N_pad, D_pad) != (N, D):
        x_p = jnp.pad(x, ((0, N_pad - N), (0, D_pad - D)))
    loc_p, inv_p = loc, inv_scale
    if D_pad != D:
        loc_p = jnp.pad(loc, ((0, 0), (0, D_pad - D)))
        inv_p = jnp.pad(inv_scale, ((0, 0), (0, D_pad - D)),
                        constant_values=1.0)

    grid = (N_pad // tile_rows,)
    out = pl.pallas_call(
        _input_scaler_kernel,
        out_shape=jax.ShapeDtypeStruct((N_pad, D_pad), out_dtype),
        grid_spec=pltpu.PrefetchScalarGridSpec(
            num_scalar_prefetch=0,
            grid=grid,
            in_specs=[
                pl.BlockSpec((tile_rows, D_pad), lambda i: (i, 0)),  # x row tile
                pl.BlockSpec((1, D_pad), lambda i: (0, 0)),          # loc (resident)
                pl.BlockSpec((1, D_pad), lambda i: (0, 0)),          # 1/scale (resident)
            ],
            out_specs=pl.BlockSpec((tile_rows, D_pad), lambda i: (i, 0)),
        ),
        compiler_params=pltpu.CompilerParams(
            dimension_semantics=("parallel",),
            vmem_limit_bytes=48 << 20,
        ),
    )(x_p, loc_p, inv_p)

    if (N_pad, D_pad) != (N, D):
        out = out[:N, :D]
    return out


def init_weights(data):
    """Parameter setup (glue, plain JAX): matches InputScaler.init_weights."""
    loc = jnp.mean(data, axis=0, keepdims=True)
    # torch.Tensor.std defaults to the unbiased estimator (correction=1).
    scale = jnp.std(data, axis=0, keepdims=True, ddof=1)
    scale = jnp.where(scale == 0, jnp.ones_like(scale), scale)
    inv_scale = 1.0 / scale  # zero-guard already applied, no inf possible
    return loc, scale, inv_scale


if __name__ == "__main__":
    key = jax.random.PRNGKey(0)
    k_data, k_x = jax.random.split(key)

    # Small PINN-style shapes: N points, D spatial/feature coordinates.
    N, D = 1000, 4
    data = jax.random.normal(k_data, (N, D), dtype=jnp.float32) * 3.0 + 1.5
    x = jax.random.normal(k_x, (N, D), dtype=jnp.float32) * 3.0 + 1.5

    loc, scale, inv_scale = init_weights(data)

    out = input_scaler_forward(x, loc, inv_scale)
    out = jax.block_until_ready(out)

    # Reference (plain JAX) check of the forward semantics.
    ref = (x - loc) / scale
    assert out.shape == x.shape and out.dtype == x.dtype
    assert jnp.allclose(out, ref, atol=1e-5, rtol=1e-5)

    print("KERNEL_OK")
</pallas_src>

<mosaic_0001>
module attributes {stable_mosaic.version = 11 : i64} {
  func.func @_input_scaler_kernel(%arg0: i32, %arg1: memref<1000x128xf32, #tpu.memory_space<vmem>>, %arg2: memref<1x128xf32, #tpu.memory_space<vmem>>, %arg3: memref<1x128xf32, #tpu.memory_space<vmem>>, %arg4: memref<1000x128xf32, #tpu.memory_space<vmem>>) attributes {dimension_semantics = [#tpu.dimension_semantics<parallel>], iteration_bounds = array<i64: 1>, scalar_prefetch = 0 : i64, scratch_operands = 0 : i64, tpu.core_type = #tpu.core_type<tc>, window_params = [{transform_indices = @transform_0, window_bounds = array<i64: 1000, 128>}, {pipeline_mode = #tpu.pipeline_mode<synchronous>, transform_indices = @transform_1, window_bounds = array<i64: 1, 128>}, {pipeline_mode = #tpu.pipeline_mode<synchronous>, transform_indices = @transform_2, window_bounds = array<i64: 1, 128>}, {transform_indices = @transform_3, window_bounds = array<i64: 1000, 128>}]} {
    %c0 = arith.constant 0 : index
    %c0_0 = arith.constant 0 : index
    %0 = vector.load %arg2[%c0, %c0_0] : memref<1x128xf32, #tpu.memory_space<vmem>>, vector<1x128xf32>
    %c0_1 = arith.constant 0 : index
    %c0_2 = arith.constant 0 : index
    %1 = vector.load %arg3[%c0_1, %c0_2] : memref<1x128xf32, #tpu.memory_space<vmem>>, vector<1x128xf32>
    %c0_3 = arith.constant 0 : index
    %c0_4 = arith.constant 0 : index
    %2 = vector.load %arg1[%c0_3, %c0_4] : memref<1000x128xf32, #tpu.memory_space<vmem>>, vector<1000x128xf32>
    %3 = vector.broadcast %0 : vector<1x128xf32> to vector<1000x128xf32>
    %4 = arith.subf %2, %3 : vector<1000x128xf32>
    %5 = vector.broadcast %1 : vector<1x128xf32> to vector<1000x128xf32>
    %6 = arith.mulf %4, %5 : vector<1000x128xf32>
    %c0_5 = arith.constant 0 : index
    %c0_6 = arith.constant 0 : index
    %7 = vector.load %arg4[%c0_5, %c0_6] : memref<1000x128xf32, #tpu.memory_space<vmem>>, vector<1000x128xf32>
    tpu.vector_store %arg4[%c0_5, %c0_6], %6 {strides = array<i32>} : memref<1000x128xf32, #tpu.memory_space<vmem>>, vector<1000x128xf32>,
    return
  }
  func.func @transform_0(%arg0: i32) -> (i32, i32) {
    %c0_i32 = arith.constant 0 : i32
    %c0_i32_0 = arith.constant 0 : i32
    return %arg0, %c0_i32 : i32, i32
  }
  func.func @transform_1(%arg0: i32) -> (i32, i32) {
    %c0_i32 = arith.constant 0 : i32
    %c0_i32_0 = arith.constant 0 : i32
    %c0_i32_1 = arith.constant 0 : i32
    return %c0_i32, %c0_i32_0 : i32, i32
  }
  func.func @transform_2(%arg0: i32) -> (i32, i32) {
    %c0_i32 = arith.constant 0 : i32
    %c0_i32_0 = arith.constant 0 : i32
    %c0_i32_1 = arith.constant 0 : i32
    return %c0_i32, %c0_i32_0 : i32, i32
  }
  func.func @transform_3(%arg0: i32) -> (i32, i32) {
    %c0_i32 = arith.constant 0 : i32
    %c0_i32_0 = arith.constant 0 : i32
    return %arg0, %c0_i32 : i32, i32
  }
}

</mosaic_0001>

<llo_original>
// kernel: tpu_custom_call.1
$region0: #{tpu_custom_call.1}
  #allocation0 [shape = 'u32[]', space=smem, size = 0x4, offset = 0x4, fixed_abs, tag = 'smem constant byte address 0x4 - core index']
  #allocation1 [shape = 'u32[144,128]{1,0:T(1,128)}', space=vmem, size = 0x12000, scoped, tag = 'internal scratch']
  %s0 = inlined_call_operand.hbm [shape: f32[1000,128], index: 0, kind: input, shape index: {}]
  %s1 = inlined_call_operand.vmem [shape: f32[1,128], index: 1, kind: input, shape index: {}]
  %s2 = inlined_call_operand.vmem [shape: f32[1,128], index: 2, kind: input, shape index: {}]
  %s3 = inlined_call_operand.hbm [shape: f32[1000,128], index: 3, kind: output, shape index: {}]
  %s4 = sld [smem:[#allocation0]]
  $region26: #{tpu_custom_call.1} parent=0
    _
  %s6 = ssub.s32 1, %s4
  %s7 = scalar_select 0, %s6, %s4
  $region1: #{tpu_custom_call.1} parent=0
    #allocation2 [shape = 'u8[512000]{0}', space=vmem, size = 0x7d000, scoped, tag = 'input window, operand 0, single buffered']
    #allocation3 [shape = 's32[1]{0}', space=sflag, size = 0x4, scoped, tag = 'scoped memory for tpu_custom_call.1']
    #allocation4 [shape = 's32[1]{0}', space=sflag, size = 0x4, scoped, tag = 'scoped memory for tpu_custom_call.1']
    #allocation5 [shape = 'u8[512000]{0}', space=vmem, size = 0x7d000, scoped, tag = 'output window, operand 0, single buffered']
    %8 = vsyncpa [#allocation3], 0
    %9 = vsyncpa [#allocation4], 0
    // Predicated region
    $region2: #{tpu_custom_call.1} parent=1 // pred_check
      _
    $region3: #{tpu_custom_call.1} parent=1 // pred_check_branch
      %11 = sbr.rel (0) target = $region5
    $region4: #{tpu_custom_call.1} parent=1 // pred_region
      %s13 = ssub.s32 16000, 16000
      %14 = vsyncadd [#allocation3], %s13
      %s15 = sshll.u32 [#allocation2], 4
      %s16 = int_to_ptr.vmem [resolvable:$true] %s15
      %21 = dma.hbm_to_vmem [thread:$0]  %s0, 16000, %s16, [#allocation3], 128, 128, 8
    $region5: #{tpu_custom_call.1} parent=1 // pred_fallthru
      _
    // Predicated region
    $region6: #{tpu_custom_call.1} parent=1 // pred_check
      _
    $region7: #{tpu_custom_call.1} parent=1 // pred_check_branch
      %23 = sbr.rel (0) target = $region9
    $region8: #{tpu_custom_call.1} parent=1 // pred_region
      _
    $region9: #{tpu_custom_call.1} parent=1 // pred_fallthru
      _
    // Predicated region
    $region10: #{tpu_custom_call.1} parent=1 // pred_check
      _
    $region11: #{tpu_custom_call.1} parent=1 // pred_check_branch
      %25 = sbr.rel (0) target = $region13
    $region12: #{tpu_custom_call.1} parent=1 // pred_region
      _
    $region13: #{tpu_custom_call.1} parent=1 // pred_fallthru
      _
    // Predicated region
    $region14: #{tpu_custom_call.1} parent=1 // pred_check
      _
    $region15: #{tpu_custom_call.1} parent=1 // pred_check_branch
      %27 = sbr.rel (0) target = $region17
    $region16: #{tpu_custom_call.1} parent=1 // pred_region
      %28 = dma.done [#allocation3], 16000
    $region17: #{tpu_custom_call.1} parent=1 // pred_fallthru
      _
    %v29 = vld [vmem:[%s1] sm:$0x1]
    %v30 = vld [vmem:[%s2] sm:$0x1]
    %v31 = vld [vmem:[#allocation2] sm:$0xff]
    %v32 = vld [vmem:[#allocation2 + $0x8] sm:$0xff]
    %v33 = vld [vmem:[#allocation2 + $0x10] sm:$0xff]
    %v34 = vld [vmem:[#allocation2 + $0x18] sm:$0xff]
    %v35 = vld [vmem:[#allocation2 + $0x20] sm:$0xff]
    %v36 = vld [vmem:[#allocation2 + $0x28] sm:$0xff]
    %v37 = vld [vmem:[#allocation2 + $0x30] sm:$0xff]
    %v38 = vld [vmem:[#allocation2 + $0x38] sm:$0xff]
    %v39 = vld [vmem:[#allocation2 + $0x40] sm:$0xff]
    %v40 = vld [vmem:[#allocation2 + $0x48] sm:$0xff]
    %v41 = vld [vmem:[#allocation2 + $0x50] sm:$0xff]
    %v42 = vld [vmem:[#allocation2 + $0x58] sm:$0xff]
    %v43 = vld [vmem:[#allocation2 + $0x60] sm:$0xff]
    %v44 = vld [vmem:[#allocation2 + $0x68] sm:$0xff]
    %v45 = vld [vmem:[#allocation2 + $0x70] sm:$0xff]
    %v46 = vld [vmem:[#allocation2 + $0x78] sm:$0xff]
    %v47 = vld [vmem:[#allocation2 + $0x80] sm:$0xff]
    %v48 = vld [vmem:[#allocation2 + $0x88] sm:$0xff]
    %v49 = vld [vmem:[#allocation2 + $0x90] sm:$0xff]
    %v50 = vld [vmem:[#allocation2 + $0x98] sm:$0xff]
    %v51 = vld [vmem:[#allocation2 + $0xa0] sm:$0xff]
    %v52 = vld [vmem:[#allocation2 + $0xa8] sm:$0xff]
    %v53 = vld [vmem:[#allocation2 + $0xb0] sm:$0xff]
    %v54 = vld [vmem:[#allocation2 + $0xb8] sm:$0xff]
    %v55 = vld [vmem:[#allocation2 + $0xc0] sm:$0xff]
    %v56 = vld [vmem:[#allocation2 + $0xc8] sm:$0xff]
    %v57 = vld [vmem:[#allocation2 + $0xd0] sm:$0xff]
    %v58 = vld [vmem:[#allocation2 + $0xd8] sm:$0xff]
    %v59 = vld [vmem:[#allocation2 + $0xe0] sm:$0xff]
    %v60 = vld [vmem:[#allocation2 + $0xe8] sm:$0xff]
    %v61 = vld [vmem:[#allocation2 + $0xf0] sm:$0xff]
    %v62 = vld [vmem:[#allocation2 + $0xf8] sm:$0xff]
    %v63 = vld [vmem:[#allocation2 + $0x100] sm:$0xff]
    %v64 = vld [vmem:[#allocation2 + $0x108] sm:$0xff]
    %v65 = vld [vmem:[#allocation2 + $0x110] sm:$0xff]
    %v66 = vld [vmem:[#allocation2 + $0x118] sm:$0xff]
    %v67 = vld [vmem:[#allocation2 + $0x120] sm:$0xff]
    %v68 = vld [vmem:[#allocation2 + $0x128] sm:$0xff]
    %v69 = vld [vmem:[#allocation2 + $0x130] sm:$0xff]
    %v70 = vld [vmem:[#allocation2 + $0x138] sm:$0xff]
    %v71 = vld [vmem:[#allocation2 + $0x140] sm:$0xff]
    %v72 = vld [vmem:[#allocation2 + $0x148] sm:$0xff]
    %v73 = vld [vmem:[#allocation2 + $0x150] sm:$0xff]
    %v74 = vld [vmem:[#allocation2 + $0x158] sm:$0xff]
    %v75 = vld [vmem:[#allocation2 + $0x160] sm:$0xff]
    %v76 = vld [vmem:[#allocation2 + $0x168] sm:$0xff]
    %v77 = vld [vmem:[#allocation2 + $0x170] sm:$0xff]
    %v78 = vld [vmem:[#allocation2 + $0x178] sm:$0xff]
    %v79 = vld [vmem:[#allocation2 + $0x180] sm:$0xff]
    %v80 = vld [vmem:[#allocation2 + $0x188] sm:$0xff]
    %v81 = vld [vmem:[#allocation2 + $0x190] sm:$0xff]
    %v82 = vld [vmem:[#allocation2 + $0x198] sm:$0xff]
    %v83 = vld [vmem:[#allocation2 + $0x1a0] sm:$0xff]
    %v84 = vld [vmem:[#allocation2 + $0x1a8] sm:$0xff]
    %v85 = vld [vmem:[#allocation2 + $0x1b0] sm:$0xff]
    %v86 = vld [vmem:[#allocation2 + $0x1b8] sm:$0xff]
    %v87 = vld [vmem:[#allocation2 + $0x1c0] sm:$0xff]
    %v88 = vld [vmem:[#allocation2 + $0x1c8] sm:$0xff]
    %v89 = vld [vmem:[#allocation2 + $0x1d0] sm:$0xff]
    %v90 = vld [vmem:[#allocation2 + $0x1d8] sm:$0xff]
    %v91 = vld [vmem:[#allocation2 + $0x1e0] sm:$0xff]
    %v92 = vld [vmem:[#allocation2 + $0x1e8] sm:$0xff]
    %v93 = vld [vmem:[#allocation2 + $0x1f0] sm:$0xff]
    %v94 = vld [vmem:[#allocation2 + $0x1f8] sm:$0xff]
    %v95 = vld [vmem:[#allocation2 + $0x200] sm:$0xff]
    %v96 = vld [vmem:[#allocation2 + $0x208] sm:$0xff]
    %v97 = vld [vmem:[#allocation2 + $0x210] sm:$0xff]
    %v98 = vld [vmem:[#allocation2 + $0x218] sm:$0xff]
    %v99 = vld [vmem:[#allocation2 + $0x220] sm:$0xff]
    %v100 = vld [vmem:[#allocation2 + $0x228] sm:$0xff]
    %v101 = vld [vmem:[#allocation2 + $0x230] sm:$0xff]
    %v102 = vld [vmem:[#allocation2 + $0x238] sm:$0xff]
    %v103 = vld [vmem:[#allocation2 + $0x240] sm:$0xff]
    %v104 = vld [vmem:[#allocation2 + $0x248] sm:$0xff]
    %v105 = vld [vmem:[#allocation2 + $0x250] sm:$0xff]
    %v106 = vld [vmem:[#allocation2 + $0x258] sm:$0xff]
    %v107 = vld [vmem:[#allocation2 + $0x260] sm:$0xff]
    %v108 = vld [vmem:[#allocation2 + $0x268] sm:$0xff]
    %v109 = vld [vmem:[#allocation2 + $0x270] sm:$0xff]
    %v110 = vld [vmem:[#allocation2 + $0x278] sm:$0xff]
    %v111 = vld [vmem:[#allocation2 + $0x280] sm:$0xff]
    %v112 = vld [vmem:[#allocation2 + $0x288] sm:$0xff]
    %v113 = vld [vmem:[#allocation2 + $0x290] sm:$0xff]
    %v114 = vld [vmem:[#allocation2 + $0x298] sm:$0xff]
    %v115 = vld [vmem:[#allocation2 + $0x2a0] sm:$0xff]
    %v116 = vld [vmem:[#allocation2 + $0x2a8] sm:$0xff]
    %v117 = vld [vmem:[#allocation2 + $0x2b0] sm:$0xff]
    %v118 = vld [vmem:[#allocation2 + $0x2b8] sm:$0xff]
    %v119 = vld [vmem:[#allocation2 + $0x2c0] sm:$0xff]
    %v120 = vld [vmem:[#allocation2 + $0x2c8] sm:$0xff]
    %v121 = vld [vmem:[#allocation2 + $0x2d0] sm:$0xff]
    %v122 = vld [vmem:[#allocation2 + $0x2d8] sm:$0xff]
    %v123 = vld [vmem:[#allocation2 + $0x2e0] sm:$0xff]
    %v124 = vld [vmem:[#allocation2 + $0x2e8] sm:$0xff]
    %v125 = vld [vmem:[#allocation2 + $0x2f0] sm:$0xff]
    %v126 = vld [vmem:[#allocation2 + $0x2f8] sm:$0xff]
    %v127 = vld [vmem:[#allocation2 + $0x300] sm:$0xff]
    %v128 = vld [vmem:[#allocation2 + $0x308] sm:$0xff]
    %v129 = vld [vmem:[#allocation2 + $0x310] sm:$0xff]
    %v130 = vld [vmem:[#allocation2 + $0x318] sm:$0xff]
    %v131 = vld [vmem:[#allocation2 + $0x320] sm:$0xff]
    %v132 = vld [vmem:[#allocation2 + $0x328] sm:$0xff]
    %v133 = vld [vmem:[#allocation2 + $0x330] sm:$0xff]
    %v134 = vld [vmem:[#allocation2 + $0x338] sm:$0xff]
    %v135 = vld [vmem:[#allocation2 + $0x340] sm:$0xff]
    %v136 = vld [vmem:[#allocation2 + $0x348] sm:$0xff]
    %v137 = vld [vmem:[#allocation2 + $0x350] sm:$0xff]
    %v138 = vld [vmem:[#allocation2 + $0x358] sm:$0xff]
    %v139 = vld [vmem:[#allocation2 + $0x360] sm:$0xff]
    %v140 = vld [vmem:[#allocation2 + $0x368] sm:$0xff]
    %v141 = vld [vmem:[#allocation2 + $0x370] sm:$0xff]
    %v142 = vld [vmem:[#allocation2 + $0x378] sm:$0xff]
    %v143 = vld [vmem:[#allocation2 + $0x380] sm:$0xff]
    %v144 = vld [vmem:[#allocation2 + $0x388] sm:$0xff]
    %v145 = vld [vmem:[#allocation2 + $0x390] sm:$0xff]
    %v146 = vld [vmem:[#allocation2 + $0x398] sm:$0xff]
    %v147 = vld [vmem:[#allocation2 + $0x3a0] sm:$0xff]
    %v148 = vld [vmem:[#allocation2 + $0x3a8] sm:$0xff]
    %v149 = vld [vmem:[#allocation2 + $0x3b0] sm:$0xff]
    %v150 = vld [vmem:[#allocation2 + $0x3b8] sm:$0xff]
    %v151 = vld [vmem:[#allocation2 + $0x3c0] sm:$0xff]
    %v152 = vld [vmem:[#allocation2 + $0x3c8] sm:$0xff]
    %v153 = vld [vmem:[#allocation2 + $0x3d0] sm:$0xff]
    %v154 = vld [vmem:[#allocation2 + $0x3d8] sm:$0xff]
    %v155 = vld [vmem:[#allocation2 + $0x3e0] sm:$0xff]
    %v157 = vlaneseq
    %v158 = vshrl.u32 %v157, 7
    %v159 = vsub.s32 0, %v158
    %v160 = vrot.slane %v29, %v159
    %v162 = vsub.f32 %v31, %v160
    %v163 = vsub.f32 %v32, %v160
    %v164 = vsub.f32 %v33, %v160
    %v165 = vsub.f32 %v34, %v160
    %v166 = vsub.f32 %v35, %v160
    %v167 = vsub.f32 %v36, %v160
    %v168 = vsub.f32 %v37, %v160
    %v169 = vsub.f32 %v38, %v160
    %v170 = vsub.f32 %v39, %v160
    %v171 = vsub.f32 %v40, %v160
    %v172 = vsub.f32 %v41, %v160
    %v173 = vsub.f32 %v42, %v160
    %v174 = vsub.f32 %v43, %v160
    %v175 = vsub.f32 %v44, %v160
    %v176 = vsub.f32 %v45, %v160
    %v177 = vsub.f32 %v46, %v160
    %v178 = vsub.f32 %v47, %v160
    %v179 = vsub.f32 %v48, %v160
    %v180 = vsub.f32 %v49, %v160
    %v181 = vsub.f32 %v50, %v160
    %v182 = vsub.f32 %v51, %v160
    %v183 = vsub.f32 %v52, %v160
    %v184 = vsub.f32 %v53, %v160
    %v185 = vsub.f32 %v54, %v160
    %v186 = vsub.f32 %v55, %v160
    %v187 = vsub.f32 %v56, %v160
    %v188 = vsub.f32 %v57, %v160
    %v189 = vsub.f32 %v58, %v160
    %v190 = vsub.f32 %v59, %v160
    %v191 = vsub.f32 %v60, %v160
    %v192 = vsub.f32 %v61, %v160
    %v193 = vsub.f32 %v62, %v160
    %v194 = vsub.f32 %v63, %v160
    %v195 = vsub.f32 %v64, %v160
    %v196 = vsub.f32 %v65, %v160
    %v197 = vsub.f32 %v66, %v160
    %v198 = vsub.f32 %v67, %v160
    %v199 = vsub.f32 %v68, %v160
    %v200 = vsub.f32 %v69, %v160
    %v201 = vsub.f32 %v70, %v160
    %v202 = vsub.f32 %v71, %v160
    %v203 = vsub.f32 %v72, %v160
    %v204 = vsub.f32 %v73, %v160
    %v205 = vsub.f32 %v74, %v160
    %v206 = vsub.f32 %v75, %v160
    %v207 = vsub.f32 %v76, %v160
    %v208 = vsub.f32 %v77, %v160
    %v209 = vsub.f32 %v78, %v160
    %v210 = vsub.f32 %v79, %v160
    %v211 = vsub.f32 %v80, %v160
    %v212 = vsub.f32 %v81, %v160
    %v213 = vsub.f32 %v82, %v160
    %v214 = vsub.f32 %v83, %v160
    %v215 = vsub.f32 %v84, %v160
    %v216 = vsub.f32 %v85, %v160
    %v217 = vsub.f32 %v86, %v160
    %v218 = vsub.f32 %v87, %v160
    %v219 = vsub.f32 %v88, %v160
    %v220 = vsub.f32 %v89, %v160
    %v221 = vsub.f32 %v90, %v160
    %v222 = vsub.f32 %v91, %v160
    %v223 = vsub.f32 %v92, %v160
    %v224 = vsub.f32 %v93, %v160
    %v225 = vsub.f32 %v94, %v160
    %v226 = vsub.f32 %v95, %v160
    %v227 = vsub.f32 %v96, %v160
    %v228 = vsub.f32 %v97, %v160
    %v229 = vsub.f32 %v98, %v160
    %v230 = vsub.f32 %v99, %v160
    %v231 = vsub.f32 %v100, %v160
    %v232 = vsub.f32 %v101, %v160
    %v233 = vsub.f32 %v102, %v160
    %v234 = vsub.f32 %v103, %v160
    %v235 = vsub.f32 %v104, %v160
    %v236 = vsub.f32 %v105, %v160
    %v237 = vsub.f32 %v106, %v160
    %v238 = vsub.f32 %v107, %v160
    %v239 = vsub.f32 %v108, %v160
    %v240 = vsub.f32 %v109, %v160
    %v241 = vsub.f32 %v110, %v160
    %v242 = vsub.f32 %v111, %v160
    %v243 = vsub.f32 %v112, %v160
    %v244 = vsub.f32 %v113, %v160
    %v245 = vsub.f32 %v114, %v160
    %v246 = vsub.f32 %v115, %v160
    %v247 = vsub.f32 %v116, %v160
    %v248 = vsub.f32 %v117, %v160
    %v249 = vsub.f32 %v118, %v160
    %v250 = vsub.f32 %v119, %v160
    %v251 = vsub.f32 %v120, %v160
    %v252 = vsub.f32 %v121, %v160
    %v253 = vsub.f32 %v122, %v160
    %v254 = vsub.f32 %v123, %v160
    %v255 = vsub.f32 %v124, %v160
    %v256 = vsub.f32 %v125, %v160
    %v257 = vsub.f32 %v126, %v160
    %v258 = vsub.f32 %v127, %v160
    %v259 = vsub.f32 %v128, %v160
    %v260 = vsub.f32 %v129, %v160
    %v261 = vsub.f32 %v130, %v160
    %v262 = vsub.f32 %v131, %v160
    %v263 = vsub.f32 %v132, %v160
    %v264 = vsub.f32 %v133, %v160
    %v265 = vsub.f32 %v134, %v160
    %v266 = vsub.f32 %v135, %v160
    %v267 = vsub.f32 %v136, %v160
    %v268 = vsub.f32 %v137, %v160
    %v269 = vsub.f32 %v138, %v160
    %v270 = vsub.f32 %v139, %v160
    %v271 = vsub.f32 %v140, %v160
    %v272 = vsub.f32 %v141, %v160
    %v273 = vsub.f32 %v142, %v160
    %v274 = vsub.f32 %v143, %v160
    %v275 = vsub.f32 %v144, %v160
    %v276 = vsub.f32 %v145, %v160
    %v277 = vsub.f32 %v146, %v160
    %v278 = vsub.f32 %v147, %v160
    %v279 = vsub.f32 %v148, %v160
    %v280 = vsub.f32 %v149, %v160
    %v281 = vsub.f32 %v150, %v160
    %v282 = vsub.f32 %v151, %v160
    %v283 = vsub.f32 %v152, %v160
    %v284 = vsub.f32 %v153, %v160
    %v285 = vsub.f32 %v154, %v160
    %v286 = vsub.f32 %v155, %v160
    %v288 = vlaneseq
    %v289 = vshrl.u32 %v288, 7
    %v290 = vsub.s32 0, %v289
    %v291 = vrot.slane %v30, %v290
    %v293 = vmul.f32 %v162, %v291
    %v294 = vmul.f32 %v163, %v291
    %v295 = vmul.f32 %v164, %v291
    %v296 = vmul.f32 %v165, %v291
    %v297 = vmul.f32 %v166, %v291
    %v298 = vmul.f32 %v167, %v291
    %v299 = vmul.f32 %v168, %v291
    %v300 = vmul.f32 %v169, %v291
    %v301 = vmul.f32 %v170, %v291
    %v302 = vmul.f32 %v171, %v291
    %v303 = vmul.f32 %v172, %v291
    %v304 = vmul.f32 %v173, %v291
    %v305 = vmul.f32 %v174, %v291
    %v306 = vmul.f32 %v175, %v291
    %v307 = vmul.f32 %v176, %v291
    %v308 = vmul.f32 %v177, %v291
    %v309 = vmul.f32 %v178, %v291
    %v310 = vmul.f32 %v179, %v291
    %v311 = vmul.f32 %v180, %v291
    %v312 = vmul.f32 %v181, %v291
    %v313 = vmul.f32 %v182, %v291
    %v314 = vmul.f32 %v183, %v291
    %v315 = vmul.f32 %v184, %v291
    %v316 = vmul.f32 %v185, %v291
    %v317 = vmul.f32 %v186, %v291
    %v318 = vmul.f32 %v187, %v291
    %v319 = vmul.f32 %v188, %v291
    %v320 = vmul.f32 %v189, %v291
    %v321 = vmul.f32 %v190, %v291
    %v322 = vmul.f32 %v191, %v291
    %v323 = vmul.f32 %v192, %v291
    %v324 = vmul.f32 %v193, %v291
    %v325 = vmul.f32 %v194, %v291
    %v326 = vmul.f32 %v195, %v291
    %v327 = vmul.f32 %v196, %v291
    %v328 = vmul.f32 %v197, %v291
    %v329 = vmul.f32 %v198, %v291
    %v330 = vmul.f32 %v199, %v291
    %v331 = vmul.f32 %v200, %v291
    %v332 = vmul.f32 %v201, %v291
    %v333 = vmul.f32 %v202, %v291
    %v334 = vmul.f32 %v203, %v291
    %v335 = vmul.f32 %v204, %v291
    %v336 = vmul.f32 %v205, %v291
    %v337 = vmul.f32 %v206, %v291
    %v338 = vmul.f32 %v207, %v291
    %v339 = vmul.f32 %v208, %v291
    %v340 = vmul.f32 %v209, %v291
    %v341 = vmul.f32 %v210, %v291
    %v342 = vmul.f32 %v211, %v291
    %v343 = vmul.f32 %v212, %v291
    %v344 = vmul.f32 %v213, %v291
    %v345 = vmul.f32 %v214, %v291
    %v346 = vmul.f32 %v215, %v291
    %v347 = vmul.f32 %v216, %v291
    %v348 = vmul.f32 %v217, %v291
    %v349 = vmul.f32 %v218, %v291
    %v350 = vmul.f32 %v219, %v291
    %v351 = vmul.f32 %v220, %v291
    %v352 = vmul.f32 %v221, %v291
    %v353 = vmul.f32 %v222, %v291
    %v354 = vmul.f32 %v223, %v291
    %v355 = vmul.f32 %v224, %v291
    %v356 = vmul.f32 %v225, %v291
    %v357 = vmul.f32 %v226, %v291
    %v358 = vmul.f32 %v227, %v291
    %v359 = vmul.f32 %v228, %v291
    %v360 = vmul.f32 %v229, %v291
    %v361 = vmul.f32 %v230, %v291
    %v362 = vmul.f32 %v231, %v291
    %v363 = vmul.f32 %v232, %v291
    %v364 = vmul.f32 %v233, %v291
    %v365 = vmul.f32 %v234, %v291
    %v366 = vmul.f32 %v235, %v291
    %v367 = vmul.f32 %v236, %v291
    %v368 = vmul.f32 %v237, %v291
    %v369 = vmul.f32 %v238, %v291
    %v370 = vmul.f32 %v239, %v291
    %v371 = vmul.f32 %v240, %v291
    %v372 = vmul.f32 %v241, %v291
    %v373 = vmul.f32 %v242, %v291
    %v374 = vmul.f32 %v243, %v291
    %v375 = vmul.f32 %v244, %v291
    %v376 = vmul.f32 %v245, %v291
    %v377 = vmul.f32 %v246, %v291
    %v378 = vmul.f32 %v247, %v291
    %v379 = vmul.f32 %v248, %v291
    %v380 = vmul.f32 %v249, %v291
    %v381 = vmul.f32 %v250, %v291
    %v382 = vmul.f32 %v251, %v291
    %v383 = vmul.f32 %v252, %v291
    %v384 = vmul.f32 %v253, %v291
    %v385 = vmul.f32 %v254, %v291
    %v386 = vmul.f32 %v255, %v291
    %v387 = vmul.f32 %v256, %v291
    %v388 = vmul.f32 %v257, %v291
    %v389 = vmul.f32 %v258, %v291
    %v390 = vmul.f32 %v259, %v291
    %v391 = vmul.f32 %v260, %v291
    %v392 = vmul.f32 %v261, %v291
    %v393 = vmul.f32 %v262, %v291
    %v394 = vmul.f32 %v263, %v291
    %v395 = vmul.f32 %v264, %v291
    %v396 = vmul.f32 %v265, %v291
    %v397 = vmul.f32 %v266, %v291
    %v398 = vmul.f32 %v267, %v291
    %v399 = vmul.f32 %v268, %v291
    %v400 = vmul.f32 %v269, %v291
    %v401 = vmul.f32 %v270, %v291
    %v402 = vmul.f32 %v271, %v291
    %v403 = vmul.f32 %v272, %v291
    %v404 = vmul.f32 %v273, %v291
    %v405 = vmul.f32 %v274, %v291
    %v406 = vmul.f32 %v275, %v291
    %v407 = vmul.f32 %v276, %v291
    %v408 = vmul.f32 %v277, %v291
    %v409 = vmul.f32 %v278, %v291
    %v410 = vmul.f32 %v279, %v291
    %v411 = vmul.f32 %v280, %v291
    %v412 = vmul.f32 %v281, %v291
    %v413 = vmul.f32 %v282, %v291
    %v414 = vmul.f32 %v283, %v291
    %v415 = vmul.f32 %v284, %v291
    %v416 = vmul.f32 %v285, %v291
    %v417 = vmul.f32 %v286, %v291
    %418 = vst [vmem:[#allocation5] sm:$0xff] %v293
    %419 = vst [vmem:[#allocation5 + $0x8] sm:$0xff] %v294
    %420 = vst [vmem:[#allocation5 + $0x10] sm:$0xff] %v295
    %421 = vst [vmem:[#allocation5 + $0x18] sm:$0xff] %v296
    %422 = vst [vmem:[#allocation5 + $0x20] sm:$0xff] %v297
    %423 = vst [vmem:[#allocation5 + $0x28] sm:$0xff] %v298
    %424 = vst [vmem:[#allocation5 + $0x30] sm:$0xff] %v299
    %425 = vst [vmem:[#allocation5 + $0x38] sm:$0xff] %v300
    %426 = vst [vmem:[#allocation5 + $0x40] sm:$0xff] %v301
    %427 = vst [vmem:[#allocation5 + $0x48] sm:$0xff] %v302
    %428 = vst [vmem:[#allocation5 + $0x50] sm:$0xff] %v303
    %429 = vst [vmem:[#allocation5 + $0x58] sm:$0xff] %v304
    %430 = vst [vmem:[#allocation5 + $0x60] sm:$0xff] %v305
    %431 = vst [vmem:[#allocation5 + $0x68] sm:$0xff] %v306
    %432 = vst [vmem:[#allocation5 + $0x70] sm:$0xff] %v307
    %433 = vst [vmem:[#allocation5 + $0x78] sm:$0xff] %v308
    %434 = vst [vmem:[#allocation5 + $0x80] sm:$0xff] %v309
    %435 = vst [vmem:[#allocation5 + $0x88] sm:$0xff] %v310
    %436 = vst [vmem:[#allocation5 + $0x90] sm:$0xff] %v311
    %437 = vst [vmem:[#allocation5 + $0x98] sm:$0xff] %v312
    %438 = vst [vmem:[#allocation5 + $0xa0] sm:$0xff] %v313
    %439 = vst [vmem:[#allocation5 + $0xa8] sm:$0xff] %v314
    %440 = vst [vmem:[#allocation5 + $0xb0] sm:$0xff] %v315
    %441 = vst [vmem:[#allocation5 + $0xb8] sm:$0xff] %v316
    %442 = vst [vmem:[#allocation5 + $0xc0] sm:$0xff] %v317
    %443 = vst [vmem:[#allocation5 + $0xc8] sm:$0xff] %v318
    %444 = vst [vmem:[#allocation5 + $0xd0] sm:$0xff] %v319
    %445 = vst [vmem:[#allocation5 + $0xd8] sm:$0xff] %v320
    %446 = vst [vmem:[#allocation5 + $0xe0] sm:$0xff] %v321
    %447 = vst [vmem:[#allocation5 + $0xe8] sm:$0xff] %v322
    %448 = vst [vmem:[#allocation5 + $0xf0] sm:$0xff] %v323
    %449 = vst [vmem:[#allocation5 + $0xf8] sm:$0xff] %v324
    %450 = vst [vmem:[#allocation5 + $0x100] sm:$0xff] %v325
    %451 = vst [vmem:[#allocation5 + $0x108] sm:$0xff] %v326
    %452 = vst [vmem:[#allocation5 + $0x110] sm:$0xff] %v327
    %453 = vst [vmem:[#allocation5 + $0x118] sm:$0xff] %v328
    %454 = vst [vmem:[#allocation5 + $0x120] sm:$0xff] %v329
    %455 = vst [vmem:[#allocation5 + $0x128] sm:$0xff] %v330
    %456 = vst [vmem:[#allocation5 + $0x130] sm:$0xff] %v331
    %457 = vst [vmem:[#allocation5 + $0x138] sm:$0xff] %v332
    %458 = vst [vmem:[#allocation5 + $0x140] sm:$0xff] %v333
    %459 = vst [vmem:[#allocation5 + $0x148] sm:$0xff] %v334
    %460 = vst [vmem:[#allocation5 + $0x150] sm:$0xff] %v335
    %461 = vst [vmem:[#allocation5 + $0x158] sm:$0xff] %v336
    %462 = vst [vmem:[#allocation5 + $0x160] sm:$0xff] %v337
    %463 = vst [vmem:[#allocation5 + $0x168] sm:$0xff] %v338
    %464 = vst [vmem:[#allocation5 + $0x170] sm:$0xff] %v339
    %465 = vst [vmem:[#allocation5 + $0x178] sm:$0xff] %v340
    %466 = vst [vmem:[#allocation5 + $0x180] sm:$0xff] %v341
    %467 = vst [vmem:[#allocation5 + $0x188] sm:$0xff] %v342
    %468 = vst [vmem:[#allocation5 + $0x190] sm:$0xff] %v343
    %469 = vst [vmem:[#allocation5 + $0x198] sm:$0xff] %v344
    %470 = vst [vmem:[#allocation5 + $0x1a0] sm:$0xff] %v345
    %471 = vst [vmem:[#allocation5 + $0x1a8] sm:$0xff] %v346
    %472 = vst [vmem:[#allocation5 + $0x1b0] sm:$0xff] %v347
    %473 = vst [vmem:[#allocation5 + $0x1b8] sm:$0xff] %v348
    %474 = vst [vmem:[#allocation5 + $0x1c0] sm:$0xff] %v349
    %475 = vst [vmem:[#allocation5 + $0x1c8] sm:$0xff] %v350
    %476 = vst [vmem:[#allocation5 + $0x1d0] sm:$0xff] %v351
    %477 = vst [vmem:[#allocation5 + $0x1d8] sm:$0xff] %v352
    %478 = vst [vmem:[#allocation5 + $0x1e0] sm:$0xff] %v353
    %479 = vst [vmem:[#allocation5 + $0x1e8] sm:$0xff] %v354
    %480 = vst [vmem:[#allocation5 + $0x1f0] sm:$0xff] %v355
    %481 = vst [vmem:[#allocation5 + $0x1f8] sm:$0xff] %v356
    %482 = vst [vmem:[#allocation5 + $0x200] sm:$0xff] %v357
    %483 = vst [vmem:[#allocation5 + $0x208] sm:$0xff] %v358
    %484 = vst [vmem:[#allocation5 + $0x210] sm:$0xff] %v359
    %485 = vst [vmem:[#allocation5 + $0x218] sm:$0xff] %v360
    %486 = vst [vmem:[#allocation5 + $0x220] sm:$0xff] %v361
    %487 = vst [vmem:[#allocation5 + $0x228] sm:$0xff] %v362
    %488 = vst [vmem:[#allocation5 + $0x230] sm:$0xff] %v363
    %489 = vst [vmem:[#allocation5 + $0x238] sm:$0xff] %v364
    %490 = vst [vmem:[#allocation5 + $0x240] sm:$0xff] %v365
    %491 = vst [vmem:[#allocation5 + $0x248] sm:$0xff] %v366
    %492 = vst [vmem:[#allocation5 + $0x250] sm:$0xff] %v367
    %493 = vst [vmem:[#allocation5 + $0x258] sm:$0xff] %v368
    %494 = vst [vmem:[#allocation5 + $0x260] sm:$0xff] %v369
    %495 = vst [vmem:[#allocation5 + $0x268] sm:$0xff] %v370
    %496 = vst [vmem:[#allocation5 + $0x270] sm:$0xff] %v371
    %497 = vst [vmem:[#allocation5 + $0x278] sm:$0xff] %v372
    %498 = vst [vmem:[#allocation5 + $0x280] sm:$0xff] %v373
    %499 = vst [vmem:[#allocation5 + $0x288] sm:$0xff] %v374
    %500 = vst [vmem:[#allocation5 + $0x290] sm:$0xff] %v375
    %501 = vst [vmem:[#allocation5 + $0x298] sm:$0xff] %v376
    %502 = vst [vmem:[#allocation5 + $0x2a0] sm:$0xff] %v377
    %503 = vst [vmem:[#allocation5 + $0x2a8] sm:$0xff] %v378
    %504 = vst [vmem:[#allocation5 + $0x2b0] sm:$0xff] %v379
    %505 = vst [vmem:[#allocation5 + $0x2b8] sm:$0xff] %v380
    %506 = vst [vmem:[#allocation5 + $0x2c0] sm:$0xff] %v381
    %507 = vst [vmem:[#allocation5 + $0x2c8] sm:$0xff] %v382
    %508 = vst [vmem:[#allocation5 + $0x2d0] sm:$0xff] %v383
    %509 = vst [vmem:[#allocation5 + $0x2d8] sm:$0xff] %v384
    %510 = vst [vmem:[#allocation5 + $0x2e0] sm:$0xff] %v385
    %511 = vst [vmem:[#allocation5 + $0x2e8] sm:$0xff] %v386
    %512 = vst [vmem:[#allocation5 + $0x2f0] sm:$0xff] %v387
    %513 = vst [vmem:[#allocation5 + $0x2f8] sm:$0xff] %v388
    %514 = vst [vmem:[#allocation5 + $0x300] sm:$0xff] %v389
    %515 = vst [vmem:[#allocation5 + $0x308] sm:$0xff] %v390
    %516 = vst [vmem:[#allocation5 + $0x310] sm:$0xff] %v391
    %517 = vst [vmem:[#allocation5 + $0x318] sm:$0xff] %v392
    %518 = vst [vmem:[#allocation5 + $0x320] sm:$0xff] %v393
    %519 = vst [vmem:[#allocation5 + $0x328] sm:$0xff] %v394
    %520 = vst [vmem:[#allocation5 + $0x330] sm:$0xff] %v395
    %521 = vst [vmem:[#allocation5 + $0x338] sm:$0xff] %v396
    %522 = vst [vmem:[#allocation5 + $0x340] sm:$0xff] %v397
    %523 = vst [vmem:[#allocation5 + $0x348] sm:$0xff] %v398
    %524 = vst [vmem:[#allocation5 + $0x350] sm:$0xff] %v399
    %525 = vst [vmem:[#allocation5 + $0x358] sm:$0xff] %v400
    %526 = vst [vmem:[#allocation5 + $0x360] sm:$0xff] %v401
    %527 = vst [vmem:[#allocation5 + $0x368] sm:$0xff] %v402
    %528 = vst [vmem:[#allocation5 + $0x370] sm:$0xff] %v403
    %529 = vst [vmem:[#allocation5 + $0x378] sm:$0xff] %v404
    %530 = vst [vmem:[#allocation5 + $0x380] sm:$0xff] %v405
    %531 = vst [vmem:[#allocation5 + $0x388] sm:$0xff] %v406
    %532 = vst [vmem:[#allocation5 + $0x390] sm:$0xff] %v407
    %533 = vst [vmem:[#allocation5 + $0x398] sm:$0xff] %v408
    %534 = vst [vmem:[#allocation5 + $0x3a0] sm:$0xff] %v409
    %535 = vst [vmem:[#allocation5 + $0x3a8] sm:$0xff] %v410
    %536 = vst [vmem:[#allocation5 + $0x3b0] sm:$0xff] %v411
    %537 = vst [vmem:[#allocation5 + $0x3b8] sm:$0xff] %v412
    %538 = vst [vmem:[#allocation5 + $0x3c0] sm:$0xff] %v413
    %539 = vst [vmem:[#allocation5 + $0x3c8] sm:$0xff] %v414
    %540 = vst [vmem:[#allocation5 + $0x3d0] sm:$0xff] %v415
    %541 = vst [vmem:[#allocation5 + $0x3d8] sm:$0xff] %v416
    %542 = vst [vmem:[#allocation5 + $0x3e0] sm:$0xff] %v417
    // Predicated region
    $region18: #{tpu_custom_call.1} parent=1 // pred_check
      _
    $region19: #{tpu_custom_call.1} parent=1 // pred_check_branch
      %544 = sbr.rel (0) target = $region21
    $region20: #{tpu_custom_call.1} parent=1 // pred_region
      %s546 = ssub.s32 16000, 16000
      %547 = vsyncadd [#allocation4], %s546
      %s548 = sshll.u32 [#allocation5], 4
      %s549 = int_to_ptr.vmem [resolvable:$true] %s548
      %554 = dma.vmem_to_hbm [thread:$0]  %s549, 16000, %s3, [#allocation4], 128, 128, 8
    $region21: #{tpu_custom_call.1} parent=1 // pred_fallthru
      _
    // Predicated region
    $region22: #{tpu_custom_call.1} parent=1 // pred_check
      _
    $region23: #{tpu_custom_call.1} parent=1 // pred_check_branch
      %556 = sbr.rel (0) target = $region25
    $region24: #{tpu_custom_call.1} parent=1 // pred_region
      %557 = dma.done [#allocation4], 16000
    $region25: #{tpu_custom_call.1} parent=1 // pred_fallthru
      _
    %558 = vsyncpa [#allocation3], 1
    %559 = vsyncpa [#allocation4], 1

</llo_original>
